<compile_context>
chip_gen: v6e
topology: v6e:2x2x1
jax: 0.10.0
libtpu: 0.0.40
codegen_flags: <defaults>
</compile_context>

<pallas_src>
import functools

import jax
import jax.numpy as jnp
from jax.experimental import pallas as pl
from jax.experimental.pallas import tpu as pltpu


def _round_up(n: int, m: int) -> int:
    return ((n + m - 1) // m) * m


def _pad2d(a, rows, cols):
    r, c = a.shape
    if r == rows and c == cols:
        return a
    return jnp.pad(a, ((0, rows - r), (0, cols - c)))


def prenet_kernel(x_ref, w1_ref, b1_ref, w2_ref, b2_ref, *rest, training):
    """One batch tile: (TB, D_in_p) -> (TB, D_out_p). Weights are VMEM-resident."""
    if training:
        m1_ref, m2_ref, o_ref = rest
    else:
        (o_ref,) = rest

    # ---- layer 1: Linear -> ReLU -> Dropout ----
    h = jnp.dot(x_ref[...], w1_ref[...], preferred_element_type=jnp.float32)
    h = jnp.maximum(h + b1_ref[...], 0.0)          # (TB, H_p) + (1, H_p)
    if training:
        h = h * m1_ref[...]                        # pre-scaled keep mask (0 or 1/(1-p))

    # ---- layer 2: Linear -> ReLU -> Dropout ----
    o = jnp.dot(h.astype(w2_ref.dtype), w2_ref[...],
                preferred_element_type=jnp.float32)
    o = jnp.maximum(o + b2_ref[...], 0.0)          # (TB, O_p) + (1, O_p)
    if training:
        o = o * m2_ref[...]

    o_ref[...] = o.astype(o_ref.dtype)


def prenet_forward(x, w1, b1, w2, b2, *, dropout_p=0.5, training=False,
                   rng_key=None, compute_dtype=jnp.float32, block_b=512):
    """x: (B, D_in). Weights stored transposed vs. PyTorch: w1 (D_in, H), w2 (H, D_out).

    Returns (B, D_out) float32.  Eval mode (training=False) is the exact nn.Sequential
    forward; training mode applies inverted dropout with masks drawn from `rng_key`.
    """
    B, D_in = x.shape
    H = w1.shape[1]
    D_out = w2.shape[1]
    assert w1.shape == (D_in, H) and w2.shape == (H, D_out)
    assert b1.shape == (H,) and b2.shape == (D_out,)

    # Lane-dense padding of feature dims; batch padded to a whole number of tiles.
    D_in_p = _round_up(D_in, 128)
    H_p = _round_up(H, 128)
    D_out_p = _round_up(D_out, 128)
    TB = _round_up(min(block_b, _round_up(B, 8)), 8)
    B_p = _round_up(B, TB)
    n_tiles = B_p // TB

    x_p = _pad2d(x.astype(compute_dtype), B_p, D_in_p)
    w1_p = _pad2d(w1.astype(compute_dtype), D_in_p, H_p)
    w2_p = _pad2d(w2.astype(compute_dtype), H_p, D_out_p)
    b1_p = _pad2d(b1.reshape(1, H).astype(jnp.float32), 1, H_p)
    b2_p = _pad2d(b2.reshape(1, D_out).astype(jnp.float32), 1, D_out_p)

    in_arrays = [x_p, w1_p, b1_p, w2_p, b2_p]
    in_specs = [
        pl.BlockSpec((TB, D_in_p), lambda i: (i, 0)),       # batch-tiled activations
        pl.BlockSpec((D_in_p, H_p), lambda i: (0, 0)),      # weights resident in VMEM
        pl.BlockSpec((1, H_p), lambda i: (0, 0)),
        pl.BlockSpec((H_p, D_out_p), lambda i: (0, 0)),
        pl.BlockSpec((1, D_out_p), lambda i: (0, 0)),
    ]

    use_masks = bool(training) and dropout_p > 0.0
    if use_masks:
        if dropout_p >= 1.0:
            m1 = jnp.zeros((B, H), jnp.float32)
            m2 = jnp.zeros((B, D_out), jnp.float32)
        else:
            if rng_key is None:
                rng_key = jax.random.PRNGKey(0)
            k1, k2 = jax.random.split(rng_key)
            keep = 1.0 - dropout_p
            m1 = jax.random.bernoulli(k1, keep, (B, H)).astype(jnp.float32) / keep
            m2 = jax.random.bernoulli(k2, keep, (B, D_out)).astype(jnp.float32) / keep
        in_arrays += [_pad2d(m1, B_p, H_p), _pad2d(m2, B_p, D_out_p)]
        in_specs += [
            pl.BlockSpec((TB, H_p), lambda i: (i, 0)),
            pl.BlockSpec((TB, D_out_p), lambda i: (i, 0)),
        ]

    kernel = functools.partial(prenet_kernel, training=use_masks)

    out = pl.pallas_call(
        kernel,
        out_shape=jax.ShapeDtypeStruct((B_p, D_out_p), jnp.float32),
        grid_spec=pl.GridSpec(
            grid=(n_tiles,),
            in_specs=in_specs,
            out_specs=pl.BlockSpec((TB, D_out_p), lambda i: (i, 0)),
        ),
        compiler_params=pltpu.CompilerParams(
            dimension_semantics=("parallel",)),   # v7x: shard batch tiles across 2 TCs
    )(*in_arrays)

    return out[:B, :D_out]


def _init_linear(key, fan_in, fan_out):
    """Deterministic init matching nn.Linear's U(-1/sqrt(fan_in), 1/sqrt(fan_in))."""
    kw, kb = jax.random.split(key)
    bound = 1.0 / (fan_in ** 0.5)
    w = jax.random.uniform(kw, (fan_in, fan_out), jnp.float32, -bound, bound)
    b = jax.random.uniform(kb, (fan_out,), jnp.float32, -bound, bound)
    return w, b


if __name__ == "__main__":
    # Small shapes implied by the module: (batch, input_size) -> (batch, output_size)
    B, INPUT, HIDDEN, OUTPUT = 8, 32, 64, 32

    root = jax.random.PRNGKey(0)
    kx, k1, k2, kdrop = jax.random.split(root, 4)

    x = jax.random.normal(kx, (B, INPUT), jnp.float32)
    w1, b1 = _init_linear(k1, INPUT, HIDDEN)
    w2, b2 = _init_linear(k2, HIDDEN, OUTPUT)

    # ---- Eval-mode forward, f32 (dropout = identity): matches PyTorch eval. ----
    y_eval = prenet_forward(x, w1, b1, w2, b2, dropout_p=0.5, training=False)
    y_eval = jax.block_until_ready(y_eval)

    ref = jnp.maximum(
        jnp.maximum(jnp.dot(x, w1, precision=jax.lax.Precision.HIGHEST) + b1, 0.0)
        @ w2 + b2, 0.0)
    assert y_eval.shape == (B, OUTPUT)
    assert jnp.allclose(y_eval, ref, atol=1e-2, rtol=1e-2), "eval (f32) mismatch"

    # ---- Eval-mode forward with bf16 MXU inputs (f32 accumulation). ----
    y_bf16 = prenet_forward(x, w1, b1, w2, b2, dropout_p=0.5, training=False,
                            compute_dtype=jnp.bfloat16)
    y_bf16 = jax.block_until_ready(y_bf16)
    assert y_bf16.shape == (B, OUTPUT)
    assert bool(jnp.all(jnp.isfinite(y_bf16)))
    assert jnp.allclose(y_bf16, ref, atol=0.2, rtol=0.1), "eval (bf16) mismatch"

    # ---- Training-mode forward (inverted dropout, deterministic masks from kdrop). ----
    y_train = prenet_forward(x, w1, b1, w2, b2, dropout_p=0.5, training=True,
                             rng_key=kdrop)
    y_train = jax.block_until_ready(y_train)
    assert y_train.shape == (B, OUTPUT)
    assert bool(jnp.all(jnp.isfinite(y_train)))
    assert bool(jnp.all(y_train >= 0.0))  # ReLU then non-negative mask scaling

    print("KERNEL_OK")
</pallas_src>

<mosaic_0001>
module attributes {stable_mosaic.version = 11 : i64} {
  func.func @prenet_kernel(%arg0: i32, %arg1: memref<8x128xf32, #tpu.memory_space<vmem>>, %arg2: memref<128x128xf32, #tpu.memory_space<vmem>>, %arg3: memref<1x128xf32, #tpu.memory_space<vmem>>, %arg4: memref<128x128xf32, #tpu.memory_space<vmem>>, %arg5: memref<1x128xf32, #tpu.memory_space<vmem>>, %arg6: memref<8x128xf32, #tpu.memory_space<vmem>>) attributes {dimension_semantics = [#tpu.dimension_semantics<parallel>], iteration_bounds = array<i64: 1>, scalar_prefetch = 0 : i64, scratch_operands = 0 : i64, tpu.core_type = #tpu.core_type<tc>, window_params = [{transform_indices = @transform_0, window_bounds = array<i64: 8, 128>}, {pipeline_mode = #tpu.pipeline_mode<synchronous>, transform_indices = @transform_1, window_bounds = array<i64: 128, 128>}, {pipeline_mode = #tpu.pipeline_mode<synchronous>, transform_indices = @transform_2, window_bounds = array<i64: 1, 128>}, {pipeline_mode = #tpu.pipeline_mode<synchronous>, transform_indices = @transform_3, window_bounds = array<i64: 128, 128>}, {pipeline_mode = #tpu.pipeline_mode<synchronous>, transform_indices = @transform_4, window_bounds = array<i64: 1, 128>}, {transform_indices = @transform_5, window_bounds = array<i64: 8, 128>}]} {
    %c0 = arith.constant 0 : index
    %c0_0 = arith.constant 0 : index
    %0 = vector.load %arg1[%c0, %c0_0] : memref<8x128xf32, #tpu.memory_space<vmem>>, vector<8x128xf32>
    %c0_1 = arith.constant 0 : index
    %c0_2 = arith.constant 0 : index
    %1 = vector.load %arg2[%c0_1, %c0_2] : memref<128x128xf32, #tpu.memory_space<vmem>>, vector<128x128xf32>
    %cst = arith.constant dense<0.000000e+00> : vector<8x128xf32>
    %2 = tpu.matmul %0, %1, %cst {dimension_numbers = #tpu.dot_dimension_numbers<[1], [0], [0], [1], [0, 0, 1, 1], [], []>} : vector<8x128xf32>, vector<128x128xf32>, vector<8x128xf32> -> vector<8x128xf32>
    %c0_3 = arith.constant 0 : index
    %c0_4 = arith.constant 0 : index
    %3 = vector.load %arg3[%c0_3, %c0_4] : memref<1x128xf32, #tpu.memory_space<vmem>>, vector<1x128xf32>
    %4 = vector.broadcast %3 : vector<1x128xf32> to vector<8x128xf32>
    %5 = arith.addf %2, %4 : vector<8x128xf32>
    %cst_5 = arith.constant 0.000000e+00 : f32
    %6 = vector.broadcast %cst_5 : f32 to vector<8x128xf32>
    %7 = arith.maximumf %5, %6 : vector<8x128xf32>
    %c0_6 = arith.constant 0 : index
    %c0_7 = arith.constant 0 : index
    %8 = vector.load %arg4[%c0_6, %c0_7] : memref<128x128xf32, #tpu.memory_space<vmem>>, vector<128x128xf32>
    %cst_8 = arith.constant dense<0.000000e+00> : vector<8x128xf32>
    %9 = tpu.matmul %7, %8, %cst_8 {dimension_numbers = #tpu.dot_dimension_numbers<[1], [0], [0], [1], [0, 0, 1, 1], [], []>} : vector<8x128xf32>, vector<128x128xf32>, vector<8x128xf32> -> vector<8x128xf32>
    %c0_9 = arith.constant 0 : index
    %c0_10 = arith.constant 0 : index
    %10 = vector.load %arg5[%c0_9, %c0_10] : memref<1x128xf32, #tpu.memory_space<vmem>>, vector<1x128xf32>
    %11 = vector.broadcast %10 : vector<1x128xf32> to vector<8x128xf32>
    %12 = arith.addf %9, %11 : vector<8x128xf32>
    %cst_11 = arith.constant 0.000000e+00 : f32
    %13 = vector.broadcast %cst_11 : f32 to vector<8x128xf32>
    %14 = arith.maximumf %12, %13 : vector<8x128xf32>
    %c0_12 = arith.constant 0 : index
    %c0_13 = arith.constant 0 : index
    %15 = vector.load %arg6[%c0_12, %c0_13] : memref<8x128xf32, #tpu.memory_space<vmem>>, vector<8x128xf32>
    tpu.vector_store %arg6[%c0_12, %c0_13], %14 {strides = array<i32>} : memref<8x128xf32, #tpu.memory_space<vmem>>, vector<8x128xf32>,
    return
  }
  func.func @transform_0(%arg0: i32) -> (i32, i32) {
    %c0_i32 = arith.constant 0 : i32
    %c0_i32_0 = arith.constant 0 : i32
    return %arg0, %c0_i32 : i32, i32
  }
  func.func @transform_1(%arg0: i32) -> (i32, i32) {
    %c0_i32 = arith.constant 0 : i32
    %c0_i32_0 = arith.constant 0 : i32
    %c0_i32_1 = arith.constant 0 : i32
    return %c0_i32, %c0_i32_0 : i32, i32
  }
  func.func @transform_2(%arg0: i32) -> (i32, i32) {
    %c0_i32 = arith.constant 0 : i32
    %c0_i32_0 = arith.constant 0 : i32
    %c0_i32_1 = arith.constant 0 : i32
    return %c0_i32, %c0_i32_0 : i32, i32
  }
  func.func @transform_3(%arg0: i32) -> (i32, i32) {
    %c0_i32 = arith.constant 0 : i32
    %c0_i32_0 = arith.constant 0 : i32
    %c0_i32_1 = arith.constant 0 : i32
    return %c0_i32, %c0_i32_0 : i32, i32
  }
  func.func @transform_4(%arg0: i32) -> (i32, i32) {
    %c0_i32 = arith.constant 0 : i32
    %c0_i32_0 = arith.constant 0 : i32
    %c0_i32_1 = arith.constant 0 : i32
    return %c0_i32, %c0_i32_0 : i32, i32
  }
  func.func @transform_5(%arg0: i32) -> (i32, i32) {
    %c0_i32 = arith.constant 0 : i32
    %c0_i32_0 = arith.constant 0 : i32
    return %arg0, %c0_i32 : i32, i32
  }
}

</mosaic_0001>

<llo_original>
// kernel: tpu_custom_call.1
$region0: #{tpu_custom_call.1}
  #allocation0 [shape = 'u32[]', space=smem, size = 0x4, offset = 0x4, fixed_abs, tag = 'smem constant byte address 0x4 - core index']
  #allocation1 [shape = 'u32[144,128]{1,0:T(1,128)}', space=vmem, size = 0x12000, scoped, tag = 'internal scratch']
  %s0 = inlined_call_operand.hbm [shape: f32[8,128], index: 0, kind: input, shape index: {}]
  %s1 = inlined_call_operand.hbm [shape: f32[128,128], index: 1, kind: input, shape index: {}]
  %s2 = inlined_call_operand.vmem [shape: f32[1,128], index: 2, kind: input, shape index: {}]
  %s3 = inlined_call_operand.hbm [shape: f32[128,128], index: 3, kind: input, shape index: {}]
  %s4 = inlined_call_operand.vmem [shape: f32[1,128], index: 4, kind: input, shape index: {}]
  %s5 = inlined_call_operand.hbm [shape: f32[8,128], index: 5, kind: output, shape index: {}]
  %s6 = sld [smem:[#allocation0]]
  $region42: #{tpu_custom_call.1} parent=0
    _
  %s8 = ssub.s32 1, %s6
  %s9 = scalar_select 0, %s8, %s6
  $region1: #{tpu_custom_call.1} parent=0
    #allocation2 [shape = 'u8[4096]{0}', space=vmem, size = 0x1000, scoped, tag = 'input window, operand 0, single buffered']
    #allocation3 [shape = 's32[1]{0}', space=sflag, size = 0x4, scoped, tag = 'scoped memory for tpu_custom_call.1']
    #allocation4 [shape = 's32[1]{0}', space=sflag, size = 0x4, scoped, tag = 'scoped memory for tpu_custom_call.1']
    #allocation5 [shape = 'u8[65536]{0}', space=vmem, size = 0x10000, scoped, tag = 'input window, operand 1, single buffered']
    #allocation6 [shape = 's32[1]{0}', space=sflag, size = 0x4, scoped, tag = 'scoped memory for tpu_custom_call.1']
    #allocation7 [shape = 'u8[65536]{0}', space=vmem, size = 0x10000, scoped, tag = 'input window, operand 3, single buffered']
    #allocation8 [shape = 'u8[4096]{0}', space=vmem, size = 0x1000, scoped, tag = 'output window, operand 0, single buffered']
    %10 = vsyncpa [#allocation3], 0
    %11 = vsyncpa [#allocation6], 0
    %12 = vsyncpa [#allocation4], 0
    // Predicated region
    $region2: #{tpu_custom_call.1} parent=1 // pred_check
      _
    $region3: #{tpu_custom_call.1} parent=1 // pred_check_branch
      %14 = sbr.rel (0) target = $region5
    $region4: #{tpu_custom_call.1} parent=1 // pred_region
      %s16 = ssub.s32 128, 128
      %17 = vsyncadd [#allocation3], %s16
      %s19 = sshll.u32 [#allocation2], 4
      %s20 = int_to_ptr.vmem [resolvable:$true] %s19
      %22 = dma.hbm_to_vmem [thread:$0]  %s0, 128, %s20, [#allocation3]
    $region5: #{tpu_custom_call.1} parent=1 // pred_fallthru
      _
    // Predicated region
    $region6: #{tpu_custom_call.1} parent=1 // pred_check
      _
    $region7: #{tpu_custom_call.1} parent=1 // pred_check_branch
      %24 = sbr.rel (0) target = $region9
    $region8: #{tpu_custom_call.1} parent=1 // pred_region
      %s26 = ssub.s32 2048, 2048
      %27 = vsyncadd [#allocation6], %s26
      %s28 = sshll.u32 [#allocation5], 4
      %s29 = int_to_ptr.vmem [resolvable:$true] %s28
      %34 = dma.hbm_to_vmem [thread:$0]  %s1, 2048, %s29, [#allocation6], 128, 128, 8
    $region9: #{tpu_custom_call.1} parent=1 // pred_fallthru
      _
    // Predicated region
    $region10: #{tpu_custom_call.1} parent=1 // pred_check
      _
    $region11: #{tpu_custom_call.1} parent=1 // pred_check_branch
      %36 = sbr.rel (0) target = $region13
    $region12: #{tpu_custom_call.1} parent=1 // pred_region
      _
    $region13: #{tpu_custom_call.1} parent=1 // pred_fallthru
      _
    // Predicated region
    $region14: #{tpu_custom_call.1} parent=1 // pred_check
      _
    $region15: #{tpu_custom_call.1} parent=1 // pred_check_branch
      %38 = sbr.rel (0) target = $region17
    $region16: #{tpu_custom_call.1} parent=1 // pred_region
      %s40 = ssub.s32 2048, 2048
      %41 = vsyncadd [#allocation6], %s40
      %s42 = sshll.u32 [#allocation7], 4
      %s43 = int_to_ptr.vmem [resolvable:$true] %s42
      %48 = dma.hbm_to_vmem [thread:$0]  %s3, 2048, %s43, [#allocation6], 128, 128, 8
    $region17: #{tpu_custom_call.1} parent=1 // pred_fallthru
      _
    // Predicated region
    $region18: #{tpu_custom_call.1} parent=1 // pred_check
      _
    $region19: #{tpu_custom_call.1} parent=1 // pred_check_branch
      %50 = sbr.rel (0) target = $region21
    $region20: #{tpu_custom_call.1} parent=1 // pred_region
      _
    $region21: #{tpu_custom_call.1} parent=1 // pred_fallthru
      _
    // Predicated region
    $region22: #{tpu_custom_call.1} parent=1 // pred_check
      _
    $region23: #{tpu_custom_call.1} parent=1 // pred_check_branch
      %52 = sbr.rel (0) target = $region25
    $region24: #{tpu_custom_call.1} parent=1 // pred_region
      %53 = dma.done [#allocation3], 128
    $region25: #{tpu_custom_call.1} parent=1 // pred_fallthru
      _
    // Predicated region
    $region26: #{tpu_custom_call.1} parent=1 // pred_check
      _
    $region27: #{tpu_custom_call.1} parent=1 // pred_check_branch
      %55 = sbr.rel (0) target = $region29
    $region28: #{tpu_custom_call.1} parent=1 // pred_region
      %56 = dma.done [#allocation6], 2048
    $region29: #{tpu_custom_call.1} parent=1 // pred_fallthru
      _
    // Predicated region
    $region30: #{tpu_custom_call.1} parent=1 // pred_check
      _
    $region31: #{tpu_custom_call.1} parent=1 // pred_check_branch
      %58 = sbr.rel (0) target = $region33
    $region32: #{tpu_custom_call.1} parent=1 // pred_region
      %59 = dma.done [#allocation6], 2048
    $region33: #{tpu_custom_call.1} parent=1 // pred_fallthru
      _
    %v60 = vld [vmem:[#allocation2] sm:$0xff]
    %v61 = vld [vmem:[#allocation5] sm:$0xff]
    %v62 = vld [vmem:[#allocation5 + $0x8] sm:$0xff]
    %v63 = vld [vmem:[#allocation5 + $0x10] sm:$0xff]
    %v64 = vld [vmem:[#allocation5 + $0x18] sm:$0xff]
    %v65 = vld [vmem:[#allocation5 + $0x20] sm:$0xff]
    %v66 = vld [vmem:[#allocation5 + $0x28] sm:$0xff]
    %v67 = vld [vmem:[#allocation5 + $0x30] sm:$0xff]
    %v68 = vld [vmem:[#allocation5 + $0x38] sm:$0xff]
    %v69 = vld [vmem:[#allocation5 + $0x40] sm:$0xff]
    %v70 = vld [vmem:[#allocation5 + $0x48] sm:$0xff]
    %v71 = vld [vmem:[#allocation5 + $0x50] sm:$0xff]
    %v72 = vld [vmem:[#allocation5 + $0x58] sm:$0xff]
    %v73 = vld [vmem:[#allocation5 + $0x60] sm:$0xff]
    %v74 = vld [vmem:[#allocation5 + $0x68] sm:$0xff]
    %v75 = vld [vmem:[#allocation5 + $0x70] sm:$0xff]
    %v76 = vld [vmem:[#allocation5 + $0x78] sm:$0xff]
    %v77 = vld [vmem:[%s2] sm:$0x1]
    %v79 = vlaneseq
    %v80 = vshrl.u32 %v79, 7
    %v81 = vsub.s32 0, %v80
    %v82 = vrot.slane %v77, %v81
    %84 = vmatprep.subr.mxu0 0.0
    %85 = vmatpush1.msra.mxu0 %v76
    %86 = vmatprep.subr.mxu0 0.0
    %87 = vmatpush1.msra.mxu0 %v75
    %88 = vmatprep.subr.mxu0 0.0
    %89 = vmatpush1.msra.mxu0 %v74
    %90 = vmatprep.subr.mxu0 0.0
    %91 = vmatpush1.msra.mxu0 %v73
    %92 = vmatprep.subr.mxu0 0.0
    %93 = vmatpush1.msra.mxu0 %v72
    %94 = vmatprep.subr.mxu0 0.0
    %95 = vmatpush1.msra.mxu0 %v71
    %96 = vmatprep.subr.mxu0 0.0
    %97 = vmatpush1.msra.mxu0 %v70
    %98 = vmatprep.subr.mxu0 0.0
    %99 = vmatpush1.msra.mxu0 %v69
    %100 = vmatprep.subr.mxu0 0.0
    %101 = vmatpush1.msra.mxu0 %v68
    %102 = vmatprep.subr.mxu0 0.0
    %103 = vmatpush1.msra.mxu0 %v67
    %104 = vmatprep.subr.mxu0 0.0
    %105 = vmatpush1.msra.mxu0 %v66
    %106 = vmatprep.subr.mxu0 0.0
    %107 = vmatpush1.msra.mxu0 %v65
    %108 = vmatprep.subr.mxu0 0.0
    %109 = vmatpush1.msra.mxu0 %v64
    %110 = vmatprep.subr.mxu0 0.0
    %111 = vmatpush1.msra.mxu0 %v63
    %112 = vmatprep.subr.mxu0 0.0
    %113 = vmatpush1.msra.mxu0 %v62
    %114 = vmatprep.subr.mxu0 0.0
    %115 = vmatpush1.msra.mxu0 %v61
    %116 = vmatprep.subr.mxu0 0.0
    %117 = vmatpush2.msra.mxu0 0.0
    %118 = vmatprep.subr.mxu0 0.0
    %119 = vmatpush2.msra.mxu0 0.0
    %120 = vmatprep.subr.mxu0 0.0
    %121 = vmatpush2.msra.mxu0 0.0
    %122 = vmatprep.subr.mxu0 0.0
    %123 = vmatpush2.msra.mxu0 0.0
    %124 = vmatprep.subr.mxu0 0.0
    %125 = vmatpush2.msra.mxu0 0.0
    %126 = vmatprep.subr.mxu0 0.0
    %127 = vmatpush2.msra.mxu0 0.0
    %128 = vmatprep.subr.mxu0 0.0
    %129 = vmatpush2.msra.mxu0 0.0
    %130 = vmatprep.subr.mxu0 0.0
    %131 = vmatpush2.msra.mxu0 0.0
    %132 = vmatprep.subr.mxu0 0.0
    %133 = vmatpush2.msra.mxu0 0.0
    %134 = vmatprep.subr.mxu0 0.0
    %135 = vmatpush2.msra.mxu0 0.0
    %136 = vmatprep.subr.mxu0 0.0
    %137 = vmatpush2.msra.mxu0 0.0
    %138 = vmatprep.subr.mxu0 0.0
    %139 = vmatpush2.msra.mxu0 0.0
    %140 = vmatprep.subr.mxu0 0.0
    %141 = vmatpush2.msra.mxu0 0.0
    %142 = vmatprep.subr.mxu0 0.0
    %143 = vmatpush2.msra.mxu0 0.0
    %144 = vmatprep.subr.mxu0 0.0
    %145 = vmatpush2.msra.mxu0 0.0
    %146 = vmatprep.subr.mxu0 0.0
    %147 = vmatpush2.msra.mxu0 0.0
    %148 = vmatprep.mubr.f32.mxu0 0.0
    %149 = vmatmul.mubr.f32.gmra.mxu0 %v60
    %v150 = vpop.f32.mrf.mxu0
    %v151 = vadd.f32 %v82, %v150
    %v152 = vpop.f32.mrf.mxu0
    %153 = vdwg.mxu0
    %v154 = vmax.f32 %v151, 0.0
    %v155 = vld [vmem:[#allocation7] sm:$0xff]
    %v156 = vld [vmem:[#allocation7 + $0x8] sm:$0xff]
    %v157 = vld [vmem:[#allocation7 + $0x10] sm:$0xff]
    %v158 = vld [vmem:[#allocation7 + $0x18] sm:$0xff]
    %v159 = vld [vmem:[#allocation7 + $0x20] sm:$0xff]
    %v160 = vld [vmem:[#allocation7 + $0x28] sm:$0xff]
    %v161 = vld [vmem:[#allocation7 + $0x30] sm:$0xff]
    %v162 = vld [vmem:[#allocation7 + $0x38] sm:$0xff]
    %v163 = vld [vmem:[#allocation7 + $0x40] sm:$0xff]
    %v164 = vld [vmem:[#allocation7 + $0x48] sm:$0xff]
    %v165 = vld [vmem:[#allocation7 + $0x50] sm:$0xff]
    %v166 = vld [vmem:[#allocation7 + $0x58] sm:$0xff]
    %v167 = vld [vmem:[#allocation7 + $0x60] sm:$0xff]
    %v168 = vld [vmem:[#allocation7 + $0x68] sm:$0xff]
    %v169 = vld [vmem:[#allocation7 + $0x70] sm:$0xff]
    %v170 = vld [vmem:[#allocation7 + $0x78] sm:$0xff]
    %v171 = vld [vmem:[%s4] sm:$0x1]
    %v173 = vlaneseq
    %v174 = vshrl.u32 %v173, 7
    %v175 = vsub.s32 0, %v174
    %v176 = vrot.slane %v171, %v175
    %178 = vmatprep.subr.mxu0 0.0
    %179 = vmatpush1.msra.mxu0 %v170
    %180 = vmatprep.subr.mxu0 0.0
    %181 = vmatpush1.msra.mxu0 %v169
    %182 = vmatprep.subr.mxu0 0.0
    %183 = vmatpush1.msra.mxu0 %v168
    %184 = vmatprep.subr.mxu0 0.0
    %185 = vmatpush1.msra.mxu0 %v167
    %186 = vmatprep.subr.mxu0 0.0
    %187 = vmatpush1.msra.mxu0 %v166
    %188 = vmatprep.subr.mxu0 0.0
    %189 = vmatpush1.msra.mxu0 %v165
    %190 = vmatprep.subr.mxu0 0.0
    %191 = vmatpush1.msra.mxu0 %v164
    %192 = vmatprep.subr.mxu0 0.0
    %193 = vmatpush1.msra.mxu0 %v163
    %194 = vmatprep.subr.mxu0 0.0
    %195 = vmatpush1.msra.mxu0 %v162
    %196 = vmatprep.subr.mxu0 0.0
    %197 = vmatpush1.msra.mxu0 %v161
    %198 = vmatprep.subr.mxu0 0.0
    %199 = vmatpush1.msra.mxu0 %v160
    %200 = vmatprep.subr.mxu0 0.0
    %201 = vmatpush1.msra.mxu0 %v159
    %202 = vmatprep.subr.mxu0 0.0
    %203 = vmatpush1.msra.mxu0 %v158
    %204 = vmatprep.subr.mxu0 0.0
    %205 = vmatpush1.msra.mxu0 %v157
    %206 = vmatprep.subr.mxu0 0.0
    %207 = vmatpush1.msra.mxu0 %v156
    %208 = vmatprep.subr.mxu0 0.0
    %209 = vmatpush1.msra.mxu0 %v155
    %210 = vmatprep.subr.mxu0 0.0
    %211 = vmatpush2.msra.mxu0 0.0
    %212 = vmatprep.subr.mxu0 0.0
    %213 = vmatpush2.msra.mxu0 0.0
    %214 = vmatprep.subr.mxu0 0.0
    %215 = vmatpush2.msra.mxu0 0.0
    %216 = vmatprep.subr.mxu0 0.0
    %217 = vmatpush2.msra.mxu0 0.0
    %218 = vmatprep.subr.mxu0 0.0
    %219 = vmatpush2.msra.mxu0 0.0
    %220 = vmatprep.subr.mxu0 0.0
    %221 = vmatpush2.msra.mxu0 0.0
    %222 = vmatprep.subr.mxu0 0.0
    %223 = vmatpush2.msra.mxu0 0.0
    %224 = vmatprep.subr.mxu0 0.0
    %225 = vmatpush2.msra.mxu0 0.0
    %226 = vmatprep.subr.mxu0 0.0
    %227 = vmatpush2.msra.mxu0 0.0
    %228 = vmatprep.subr.mxu0 0.0
    %229 = vmatpush2.msra.mxu0 0.0
    %230 = vmatprep.subr.mxu0 0.0
    %231 = vmatpush2.msra.mxu0 0.0
    %232 = vmatprep.subr.mxu0 0.0
    %233 = vmatpush2.msra.mxu0 0.0
    %234 = vmatprep.subr.mxu0 0.0
    %235 = vmatpush2.msra.mxu0 0.0
    %236 = vmatprep.subr.mxu0 0.0
    %237 = vmatpush2.msra.mxu0 0.0
    %238 = vmatprep.subr.mxu0 0.0
    %239 = vmatpush2.msra.mxu0 0.0
    %240 = vmatprep.subr.mxu0 0.0
    %241 = vmatpush2.msra.mxu0 0.0
    %242 = vmatprep.mubr.f32.mxu0 0.0
    %243 = vmatmul.mubr.f32.gmra.mxu0 %v154
    %v244 = vpop.f32.mrf.mxu0
    %v245 = vadd.f32 %v176, %v244
    %v246 = vpop.f32.mrf.mxu0
    %247 = vdwg.mxu0
    %v248 = vmax.f32 %v245, 0.0
    %249 = vst [vmem:[#allocation8] sm:$0xff] %v248
    // Predicated region
    $region34: #{tpu_custom_call.1} parent=1 // pred_check
      _
    $region35: #{tpu_custom_call.1} parent=1 // pred_check_branch
      %251 = sbr.rel (0) target = $region37
    $region36: #{tpu_custom_call.1} parent=1 // pred_region
      %s253 = ssub.s32 128, 128
      %254 = vsyncadd [#allocation4], %s253
      %s256 = sshll.u32 [#allocation8], 4
      %s257 = int_to_ptr.vmem [resolvable:$true] %s256
      %259 = dma.vmem_to_hbm [thread:$0]  %s257, 128, %s5, [#allocation4]
    $region37: #{tpu_custom_call.1} parent=1 // pred_fallthru
      _
    // Predicated region
    $region38: #{tpu_custom_call.1} parent=1 // pred_check
      _
    $region39: #{tpu_custom_call.1} parent=1 // pred_check_branch
      %261 = sbr.rel (0) target = $region41
    $region40: #{tpu_custom_call.1} parent=1 // pred_region
      %262 = dma.done [#allocation4], 128
    $region41: #{tpu_custom_call.1} parent=1 // pred_fallthru
      _
    %263 = vsyncpa [#allocation3], 1
    %264 = vsyncpa [#allocation6], 1
    %265 = vsyncpa [#allocation4], 1

</llo_original>
